<compile_context>
chip_gen: v7x
topology: tpu7x:2x2x1
jax: 0.10.0
libtpu: 0.0.40
codegen_flags: <defaults>
</compile_context>

<pallas_src>
import jax
import jax.numpy as jnp
from jax.experimental import pallas as pl
from jax.experimental.pallas import tpu as pltpu

LANES = 128  # TPU lane width


def _fma_kernel(scal_ref, x0_ref, x1_ref, o_ref):
    # scal_ref: (3,) f32 in SMEM -> [w0, w1, b]
    # x0_ref, x1_ref, o_ref: (tile_rows, 128) f32 VMEM tiles (lane-dense)
    w0 = scal_ref[0]
    w1 = scal_ref[1]
    b = scal_ref[2]
    # Pure VPU fused multiply-add; single write to o_ref (one full-width vst per vreg).
    o_ref[...] = x0_ref[...] * w0 + x1_ref[...] * w1 + b


def linear_flatten(x, weight, bias, *, tile_rows_max=512):
    """y = x @ weight.T + bias, flattened over dims (0, 1) -> shape (N,).

    x: (N, 2) float, weight: (1, 2), bias: (1,).
    """
    n, in_f = x.shape
    assert in_f == 2 and weight.shape == (1, 2) and bias.shape == (1,)

    # --- lane-dense layout: N maps to (sublane, lane) of (rows, 128) slabs ---
    rows = pl.cdiv(n, LANES)
    tile_rows = min(tile_rows_max, ((rows + 7) // 8) * 8)   # multiple of 8 sublanes
    rows_padded = pl.cdiv(rows, tile_rows) * tile_rows
    n_padded = rows_padded * LANES
    pad = n_padded - n

    xf = x.astype(jnp.float32)
    x0 = jnp.pad(xf[:, 0], (0, pad)).reshape(rows_padded, LANES)
    x1 = jnp.pad(xf[:, 1], (0, pad)).reshape(rows_padded, LANES)

    # Scalars for SMEM prefetch: [w0, w1, b]
    scal = jnp.stack(
        [weight[0, 0], weight[0, 1], bias[0]]
    ).astype(jnp.float32)

    grid = (rows_padded // tile_rows,)
    tile_spec = pl.BlockSpec((tile_rows, LANES), lambda i, s: (i, 0))

    y2d = pl.pallas_call(
        _fma_kernel,
        out_shape=jax.ShapeDtypeStruct((rows_padded, LANES), jnp.float32),
        grid_spec=pltpu.PrefetchScalarGridSpec(
            num_scalar_prefetch=1,
            grid=grid,
            in_specs=[tile_spec, tile_spec],
            out_specs=pl.BlockSpec((tile_rows, LANES), lambda i, s: (i, 0)),
        ),
        compiler_params=pltpu.CompilerParams(
            dimension_semantics=("parallel",),      # lets v7x split rows across its 2 TCs
            vmem_limit_bytes=32 * 1024 * 1024,       # explicit cap; blocks are far smaller
        ),
        cost_estimate=pl.CostEstimate(
            flops=4 * n_padded,
            transcendentals=0,
            bytes_accessed=12 * n_padded,            # 2 f32 in + 1 f32 out per element
        ),
    )(scal, x0, x1)

    # torch.nn.Flatten(0, 1): (N, 1) -> (N,); drop padding, row-major order preserved.
    return y2d.reshape(n_padded)[:n]


if __name__ == "__main__":
    key = jax.random.PRNGKey(0)
    k_x, k_w, k_b, k_x2 = jax.random.split(key, 4)

    IN_F, OUT_F = 2, 1

    # Deterministic parameter init (mimics nn.Linear's U[-1/sqrt(in), 1/sqrt(in)])
    bound = 1.0 / (IN_F ** 0.5)
    weight = jax.random.uniform(k_w, (OUT_F, IN_F), jnp.float32, -bound, bound)
    bias = jax.random.uniform(k_b, (OUT_F,), jnp.float32, -bound, bound)

    # Case 1: multiple of 128, small tile cap -> exercises a multi-step parallel grid.
    N1 = 4096
    x1_in = jax.random.normal(k_x, (N1, IN_F), jnp.float32)
    y1 = linear_flatten(x1_in, weight, bias, tile_rows_max=8)
    jax.block_until_ready(y1)
    y1_ref = (x1_in @ weight.T + bias).reshape(-1)
    assert y1.shape == (N1,)
    assert jnp.allclose(y1, y1_ref, atol=1e-5), "mismatch vs reference (N=4096)"

    # Case 2: ragged N -> exercises padding + single-block path.
    N2 = 1000
    x2_in = jax.random.normal(k_x2, (N2, IN_F), jnp.float32)
    y2 = linear_flatten(x2_in, weight, bias)
    jax.block_until_ready(y2)
    y2_ref = (x2_in @ weight.T + bias).reshape(-1)
    assert y2.shape == (N2,)
    assert jnp.allclose(y2, y2_ref, atol=1e-5), "mismatch vs reference (N=1000)"

    print("KERNEL_OK")
</pallas_src>

<mosaic_0001>
module attributes {stable_mosaic.version = 11 : i64} {
  func.func @_fma_kernel(%arg0: i32, %arg1: memref<3xf32, #tpu.memory_space<smem>>, %arg2: memref<8x128xf32, #tpu.memory_space<vmem>>, %arg3: memref<8x128xf32, #tpu.memory_space<vmem>>, %arg4: memref<8x128xf32, #tpu.memory_space<vmem>>) attributes {dimension_semantics = [#tpu.dimension_semantics<parallel>], iteration_bounds = array<i64: 4>, scalar_prefetch = 1 : i64, scratch_operands = 0 : i64, tpu.core_type = #tpu.core_type<tc>, window_params = [{transform_indices = @transform_0, window_bounds = array<i64: 8, 128>}, {transform_indices = @transform_1, window_bounds = array<i64: 8, 128>}, {transform_indices = @transform_2, window_bounds = array<i64: 8, 128>}]} {
    %c0 = arith.constant 0 : index
    %0 = memref.load %arg1[%c0] : memref<3xf32, #tpu.memory_space<smem>>
    %c1 = arith.constant 1 : index
    %1 = memref.load %arg1[%c1] : memref<3xf32, #tpu.memory_space<smem>>
    %c2 = arith.constant 2 : index
    %2 = memref.load %arg1[%c2] : memref<3xf32, #tpu.memory_space<smem>>
    %c0_0 = arith.constant 0 : index
    %c0_1 = arith.constant 0 : index
    %3 = vector.load %arg2[%c0_0, %c0_1] : memref<8x128xf32, #tpu.memory_space<vmem>>, vector<8x128xf32>
    %4 = vector.broadcast %0 : f32 to vector<8x128xf32>
    %5 = arith.mulf %3, %4 : vector<8x128xf32>
    %c0_2 = arith.constant 0 : index
    %c0_3 = arith.constant 0 : index
    %6 = vector.load %arg3[%c0_2, %c0_3] : memref<8x128xf32, #tpu.memory_space<vmem>>, vector<8x128xf32>
    %7 = vector.broadcast %1 : f32 to vector<8x128xf32>
    %8 = arith.mulf %6, %7 : vector<8x128xf32>
    %9 = arith.addf %5, %8 : vector<8x128xf32>
    %10 = vector.broadcast %2 : f32 to vector<8x128xf32>
    %11 = arith.addf %9, %10 : vector<8x128xf32>
    %c0_4 = arith.constant 0 : index
    %c0_5 = arith.constant 0 : index
    %12 = vector.load %arg4[%c0_4, %c0_5] : memref<8x128xf32, #tpu.memory_space<vmem>>, vector<8x128xf32>
    tpu.vector_store %arg4[%c0_4, %c0_5], %11 {strides = array<i32>} : memref<8x128xf32, #tpu.memory_space<vmem>>, vector<8x128xf32>,
    return
  }
  func.func @transform_0(%arg0: i32, %arg1: memref<3xf32, #tpu.memory_space<smem>>) -> (i32, i32) {
    %c0_i32 = arith.constant 0 : i32
    %c0_i32_0 = arith.constant 0 : i32
    return %arg0, %c0_i32 : i32, i32
  }
  func.func @transform_1(%arg0: i32, %arg1: memref<3xf32, #tpu.memory_space<smem>>) -> (i32, i32) {
    %c0_i32 = arith.constant 0 : i32
    %c0_i32_0 = arith.constant 0 : i32
    return %arg0, %c0_i32 : i32, i32
  }
  func.func @transform_2(%arg0: i32, %arg1: memref<3xf32, #tpu.memory_space<smem>>) -> (i32, i32) {
    %c0_i32 = arith.constant 0 : i32
    %c0_i32_0 = arith.constant 0 : i32
    return %arg0, %c0_i32 : i32, i32
  }
}

</mosaic_0001>

<llo_original>
// kernel: tpu_custom_call.1
$region0: #{tpu_custom_call.1}
  #allocation0 [shape = 'u32[]', space=smem, size = 0x4, offset = 0x4, fixed_abs, tag = 'smem constant byte address 0x4 - core index']
  #allocation1 [shape = 'u32[144,128]{1,0:T(1,128)}', space=vmem, size = 0x12000, scoped, tag = 'internal scratch']
  #allocation2 [shape = 's32[1]{0}', space=sflag, size = 0x4, scoped, tag = 'scoped memory for tpu_custom_call.1']
  #allocation3 [shape = 'u8[512]{0}', space=smem, size = 0x200, scoped, tag = 'prefetched SMEM operand 0']
  %s0 = inlined_call_operand.hbm [shape: f32[3], index: 0, kind: input, shape index: {}]
  %s1 = inlined_call_operand.hbm [shape: f32[32,128], index: 1, kind: input, shape index: {}]
  %s2 = inlined_call_operand.hbm [shape: f32[32,128], index: 2, kind: input, shape index: {}]
  %s3 = inlined_call_operand.hbm [shape: f32[32,128], index: 3, kind: output, shape index: {}]
  %s4 = sld [smem:[#allocation0]]
  $region49: #{tpu_custom_call.1} parent=0
    _
  %s6 = ssub.s32 1, %s4
  %s7 = scalar_select 0, %s6, %s4
  %9 = dma.hbm_to_smem %s0, 16, [#allocation3], [#allocation2]
  %10 = dma.done [#allocation2], 16
  %11 = sfence
  $region1: #{tpu_custom_call.1} parent=0
    #allocation4 [shape = 'u8[8192]{0}', space=vmem, size = 0x2000, scoped, tag = 'input window, operand 1']
    #allocation5 [shape = 's32[2]{0}', space=sflag, size = 0x8, scoped, tag = 'scoped memory for tpu_custom_call.1']
    #allocation6 [shape = 's32[2]{0}', space=sflag, size = 0x8, scoped, tag = 'scoped memory for tpu_custom_call.1']
    #allocation7 [shape = 'u8[8192]{0}', space=vmem, size = 0x2000, scoped, tag = 'input window, operand 2']
    #allocation8 [shape = 's32[2]{0}', space=sflag, size = 0x8, scoped, tag = 'scoped memory for tpu_custom_call.1']
    #allocation9 [shape = 'u8[8192]{0}', space=vmem, size = 0x2000, scoped, tag = 'output window, operand 0']
    %12 = vsyncpa [#allocation5], 0
    %s13 = scalar_lea.sflag [#allocation5], 1
    %14 = vsyncpa %s13, 0
    %15 = vsyncpa [#allocation8], 0
    %s16 = scalar_lea.sflag [#allocation8], 1
    %17 = vsyncpa %s16, 0
    %18 = vsyncpa [#allocation6], 0
    %s19 = scalar_lea.sflag [#allocation6], 1
    %20 = vsyncpa %s19, 0
    loop: start=0, step=1, limit=6
    $region2: #{tpu_custom_call.1} parent=1 // loop_pre_header
      _
    $region3: #{tpu_custom_call.1} parent=1 // loop_header
      %s22 = sphi 0, %s26
      %p23 = scmp.ge.s32.totalorder %s22, 6
      %s32 = sphi 0, %s34
      %s35 = sphi 0, %s32
      %s36 = sphi 0, %s35
      %s52 = sphi 0, %s36
      %s58 = sphi 0, %s60
      %s61 = sphi 0, %s58
      %s62 = sphi 0, %s61
      %s78 = sphi 0, %s62
      %s84 = sphi 0, %s86
      %s87 = sphi 0, %s84
      %s88 = sphi 0, %s87
      %s104 = sphi 0, %s88
    $region4: #{tpu_custom_call.1} parent=1 // loop_header_branch
      %25 = sbr.rel (%p23) target = $region8
    $region5: #{tpu_custom_call.1} parent=1 // loop_body
      %s27 = ssub.s32 %s22, 1
      %s28 = ssub.s32 %s22, 2
      %s29 = sadd.s32 %s22, 1
      %s30 = ssub.s32 %s22, %s29
      %p31 = scmp.eq.s32.totalorder %s30, 0
      %s33 = sadd.s32 %s32, 1
      %s34 = scalar_select %p31, %s32, %s33
      %p37 = pneg %p31
      %p38 = scmp.eq.s32.totalorder %s22, 3
      %p39 = por %p37, %p38
      %p40 = scmp.ne.s32.totalorder %s32, %s35
      %p41 = scmp.eq.s32.totalorder %s22, 0
      %p42 = por %p40, %p41
      %p43 = scmp.ne.s32.totalorder %s32, %s35
      %p44 = scmp.eq.s32.totalorder %s27, 3
      %p45 = por %p43, %p44
      %p46 = scmp.ne.s32.totalorder %s35, %s36
      %p47 = scmp.eq.s32.totalorder %s27, 0
      %p48 = por %p46, %p47
      %p49 = scmp.ne.s32.totalorder %s35, %s36
      %p50 = scmp.eq.s32.totalorder %s28, 3
      %p51 = por %p49, %p50
      %p53 = scmp.ne.s32.totalorder %s36, %s52
      %p54 = scmp.eq.s32.totalorder %s28, 0
      %p55 = por %p53, %p54
      %s56 = ssub.s32 %s22, %s29
      %p57 = scmp.eq.s32.totalorder %s56, 0
      %s59 = sadd.s32 %s58, 1
      %s60 = scalar_select %p57, %s58, %s59
      %p63 = pneg %p57
      %p64 = scmp.eq.s32.totalorder %s22, 3
      %p65 = por %p63, %p64
      %p66 = scmp.ne.s32.totalorder %s58, %s61
      %p67 = scmp.eq.s32.totalorder %s22, 0
      %p68 = por %p66, %p67
      %p69 = scmp.ne.s32.totalorder %s58, %s61
      %p70 = scmp.eq.s32.totalorder %s27, 3
      %p71 = por %p69, %p70
      %p72 = scmp.ne.s32.totalorder %s61, %s62
      %p73 = scmp.eq.s32.totalorder %s27, 0
      %p74 = por %p72, %p73
      %p75 = scmp.ne.s32.totalorder %s61, %s62
      %p76 = scmp.eq.s32.totalorder %s28, 3
      %p77 = por %p75, %p76
      %p79 = scmp.ne.s32.totalorder %s62, %s78
      %p80 = scmp.eq.s32.totalorder %s28, 0
      %p81 = por %p79, %p80
      %s82 = ssub.s32 %s22, %s29
      %p83 = scmp.eq.s32.totalorder %s82, 0
      %s85 = sadd.s32 %s84, 1
      %s86 = scalar_select %p83, %s84, %s85
      %p89 = pneg %p83
      %p90 = scmp.eq.s32.totalorder %s22, 3
      %p91 = por %p89, %p90
      %p92 = scmp.ne.s32.totalorder %s84, %s87
      %p93 = scmp.eq.s32.totalorder %s22, 0
      %p94 = por %p92, %p93
      %p95 = scmp.ne.s32.totalorder %s84, %s87
      %p96 = scmp.eq.s32.totalorder %s27, 3
      %p97 = por %p95, %p96
      %p98 = scmp.ne.s32.totalorder %s87, %s88
      %p99 = scmp.eq.s32.totalorder %s27, 0
      %p100 = por %p98, %p99
      %p101 = scmp.ne.s32.totalorder %s87, %s88
      %p102 = scmp.eq.s32.totalorder %s28, 3
      %p103 = por %p101, %p102
      %p105 = scmp.ne.s32.totalorder %s88, %s104
      %p106 = scmp.eq.s32.totalorder %s28, 0
      %p107 = por %p105, %p106
      %p108 = scmp.le.s32.totalorder 1, %s22
      %p109 = scmp.lt.s32.totalorder %s22, 5
      %p110 = pnand %p108, %p109
      %p111 = pneg %p110
      // Predicated region
      $region9: #{tpu_custom_call.1} parent=5 // pred_check
        _
      $region10: #{tpu_custom_call.1} parent=5 // pred_check_branch
        %113 = sbr.rel (%p110) target = $region12
      $region11: #{tpu_custom_call.1} parent=5 // pred_region
        %s114 = ssub.s32 %s22, 1
      $region12: #{tpu_custom_call.1} parent=5 // pred_fallthru
        _
      %p115 = scmp.lt.s32.totalorder %s22, 4
      // Predicated region
      $region13: #{tpu_custom_call.1} parent=5 // pred_check
        %p116 = pneg %p115
      $region14: #{tpu_custom_call.1} parent=5 // pred_check_branch
        %118 = sbr.rel (%p116) target = $region16
      $region15: #{tpu_custom_call.1} parent=5 // pred_region
        // Predicated region
        $region17: #{tpu_custom_call.1} parent=15 // pred_check
          %p119 = pneg %p42
        $region18: #{tpu_custom_call.1} parent=15 // pred_check_branch
          %121 = sbr.rel (%p119) target = $region20
        $region19: #{tpu_custom_call.1} parent=15 // pred_region
          %s122 = sand.u32 %s32, 1
          %s123 = scalar_lea.sflag [#allocation5], %s122
          %s124 = sand.u32 %s32, 1
          %s125 = smul.addr %s124, 8
          %s126 = scalar_lea.vmem [#allocation4], %s125
          %s128 = ssub.s32 128, 128
          %129 = vsyncadd %s123, %s128
          %s130 = smul.addr %s22, 128
          %s131 = scalar_lea.hbm %s1, %s130
          %s133 = sshll.u32 %s126, 4
          %s134 = int_to_ptr.vmem [resolvable:$true] %s133
          %136 = dma.hbm_to_vmem [thread:$0]  %s131, 128, %s134, %s123
        $region20: #{tpu_custom_call.1} parent=15 // pred_fallthru
          _
        // Predicated region
        $region21: #{tpu_custom_call.1} parent=15 // pred_check
          %p137 = pneg %p68
        $region22: #{tpu_custom_call.1} parent=15 // pred_check_branch
          %139 = sbr.rel (%p137) target = $region24
        $region23: #{tpu_custom_call.1} parent=15 // pred_region
          %s140 = sand.u32 %s58, 1
          %s141 = scalar_lea.sflag [#allocation8], %s140
          %s142 = sand.u32 %s58, 1
          %s143 = smul.addr %s142, 8
          %s144 = scalar_lea.vmem [#allocation7], %s143
          %s146 = ssub.s32 128, 128
          %147 = vsyncadd %s141, %s146
          %s148 = smul.addr %s22, 128
          %s149 = scalar_lea.hbm %s2, %s148
          %s151 = sshll.u32 %s144, 4
          %s152 = int_to_ptr.vmem [resolvable:$true] %s151
          %154 = dma.hbm_to_vmem [thread:$0]  %s149, 128, %s152, %s141
        $region24: #{tpu_custom_call.1} parent=15 // pred_fallthru
          _
      $region16: #{tpu_custom_call.1} parent=5 // pred_fallthru
        _
      %p155 = scmp.le.s32.totalorder 1, %s22
      %p156 = scmp.lt.s32.totalorder %s22, 5
      %p157 = pnand %p155, %p156
      %p158 = pneg %p157
      // Predicated region
      $region25: #{tpu_custom_call.1} parent=5 // pred_check
        _
      $region26: #{tpu_custom_call.1} parent=5 // pred_check_branch
        %160 = sbr.rel (%p157) target = $region28
      $region27: #{tpu_custom_call.1} parent=5 // pred_region
        %s161 = ssub.s32 %s22, 1
        %s162 = sand.u32 %s35, 1
        %s163 = scalar_lea.sflag [#allocation5], %s162
        %s164 = sand.u32 %s35, 1
        %s165 = smul.addr %s164, 8
        %s166 = scalar_lea.vmem [#allocation4], %s165
        // Predicated region
        $region29: #{tpu_custom_call.1} parent=27 // pred_check
          %p167 = pneg %p48
        $region30: #{tpu_custom_call.1} parent=27 // pred_check_branch
          %169 = sbr.rel (%p167) target = $region32
        $region31: #{tpu_custom_call.1} parent=27 // pred_region
          %170 = dma.done %s163, 128
        $region32: #{tpu_custom_call.1} parent=27 // pred_fallthru
          _
        %s171 = sand.u32 %s61, 1
        %s172 = scalar_lea.sflag [#allocation8], %s171
        %s173 = sand.u32 %s61, 1
        %s174 = smul.addr %s173, 8
        %s175 = scalar_lea.vmem [#allocation7], %s174
        // Predicated region
        $region33: #{tpu_custom_call.1} parent=27 // pred_check
          %p176 = pneg %p74
        $region34: #{tpu_custom_call.1} parent=27 // pred_check_branch
          %178 = sbr.rel (%p176) target = $region36
        $region35: #{tpu_custom_call.1} parent=27 // pred_region
          %179 = dma.done %s172, 128
        $region36: #{tpu_custom_call.1} parent=27 // pred_fallthru
          _
        %s180 = sand.u32 %s35, 1
        %s181 = scalar_lea.sflag [#allocation5], %s180
        %s182 = sand.u32 %s35, 1
        %s183 = smul.addr %s182, 8
        %s184 = scalar_lea.vmem [#allocation4], %s183
        %p185 = pneg %p48
        %p186 = pneg %p45
        %s187 = sand.u32 %s61, 1
        %s188 = scalar_lea.sflag [#allocation8], %s187
        %s189 = sand.u32 %s61, 1
        %s190 = smul.addr %s189, 8
        %s191 = scalar_lea.vmem [#allocation7], %s190
        %p192 = pneg %p74
        %p193 = pneg %p71
        %p194 = pneg %p100
        %p195 = pneg %p97
        %s196 = sand.u32 %s87, 1
        %s197 = scalar_lea.sflag [#allocation6], %s196
        %s198 = sand.u32 %s87, 1
        %s199 = smul.addr %s198, 8
        %s200 = scalar_lea.vmem [#allocation9], %s199
        %s201 = sld [smem:[#allocation3]]
        %s202 = sld [smem:[#allocation3 + $0x1]]
        %s203 = sld [smem:[#allocation3 + $0x2]]
        %v204 = vld [vmem:[%s166] sm:$0xff]
        %v205 = vstv %s201
        %v206 = vmul.f32 %v204, %v205
        %v207 = vld [vmem:[%s175] sm:$0xff]
        %v208 = vstv %s202
        %v209 = vmul.f32 %v207, %v208
        %v210 = vadd.f32 %v206, %v209
        %v211 = vstv %s203
        %v212 = vadd.f32 %v210, %v211
        %213 = vst [vmem:[%s200] sm:$0xff] %v212
        %s214 = sand.u32 %s87, 1
        %s215 = scalar_lea.sflag [#allocation6], %s214
        %s216 = sand.u32 %s87, 1
        %s217 = smul.addr %s216, 8
        %s218 = scalar_lea.vmem [#allocation9], %s217
        // Predicated region
        $region37: #{tpu_custom_call.1} parent=27 // pred_check
          %p219 = pneg %p97
        $region38: #{tpu_custom_call.1} parent=27 // pred_check_branch
          %221 = sbr.rel (%p219) target = $region40
        $region39: #{tpu_custom_call.1} parent=27 // pred_region
          %s223 = ssub.s32 128, 128
          %224 = vsyncadd %s215, %s223
          %s225 = smul.addr %s27, 128
          %s226 = scalar_lea.hbm %s3, %s225
          %s228 = sshll.u32 %s218, 4
          %s229 = int_to_ptr.vmem [resolvable:$true] %s228
          %231 = dma.vmem_to_hbm [thread:$0]  %s229, 128, %s226, %s215
        $region40: #{tpu_custom_call.1} parent=27 // pred_fallthru
          _
      $region28: #{tpu_custom_call.1} parent=5 // pred_fallthru
        _
      %p232 = scmp.le.s32.totalorder 2, %s22
      // Predicated region
      $region41: #{tpu_custom_call.1} parent=5 // pred_check
        %p233 = pneg %p232
      $region42: #{tpu_custom_call.1} parent=5 // pred_check_branch
        %235 = sbr.rel (%p233) target = $region44
      $region43: #{tpu_custom_call.1} parent=5 // pred_region
        %s236 = ssub.s32 %s22, 2
        // Predicated region
        $region45: #{tpu_custom_call.1} parent=43 // pred_check
          %p237 = pneg %p103
        $region46: #{tpu_custom_call.1} parent=43 // pred_check_branch
          %239 = sbr.rel (%p237) target = $region48
        $region47: #{tpu_custom_call.1} parent=43 // pred_region
          %s240 = sand.u32 %s88, 1
          %s241 = scalar_lea.sflag [#allocation6], %s240
          %s242 = sand.u32 %s88, 1
          %s243 = smul.addr %s242, 8
          %s244 = scalar_lea.vmem [#allocation9], %s243
          %245 = dma.done %s241, 128
        $region48: #{tpu_custom_call.1} parent=43 // pred_fallthru
          _
      $region44: #{tpu_custom_call.1} parent=5 // pred_fallthru
        _
    $region6: #{tpu_custom_call.1} parent=1 // loop_footer
      %s26 = sadd.s32 1, %s22
    $region7: #{tpu_custom_call.1} parent=1 // loop_footer_branch
      %21 = sbr.rel target = $region3
    $region8: #{tpu_custom_call.1} parent=1 // loop_exit
      _
    %246 = vsyncpa [#allocation5], 1
    %s247 = scalar_lea.sflag [#allocation5], 1
    %248 = vsyncpa %s247, 1
    %249 = vsyncpa [#allocation8], 1
    %s250 = scalar_lea.sflag [#allocation8], 1
    %251 = vsyncpa %s250, 1
    %252 = vsyncpa [#allocation6], 1
    %s253 = scalar_lea.sflag [#allocation6], 1
    %254 = vsyncpa %s253, 1

</llo_original>
